<compile_context>
chip_gen: v5e
topology: v5e:2x2
jax: 0.10.0
libtpu: 0.0.40
codegen_flags: <defaults>
</compile_context>

<pallas_src>
import functools

import jax
import jax.numpy as jnp
from jax.experimental import pallas as pl
from jax.experimental.pallas import tpu as pltpu


def _logistic_energy_kernel(x_ref, w_ref, gid_ref, heb_ref, o_ref, acc_ref, *,
                            e_pad: int):
    # x_ref:   (tm, lanes) VMEM f32   lane-dense input tile
    # w_ref:   (1, lanes)  VMEM f32   0.5*weights tiled across the lane axis
    # gid_ref: (8, lanes)  VMEM i32   lane -> group id (lane // e_pad)
    # heb_ref: (1,)        SMEM f32   0.5 * E * bias
    # o_ref:   (1, 1)      SMEM f32   per-chunk partial sum
    # acc_ref: (1,)        SMEM f32   running accumulator for this chunk
    step = pl.program_id(1)

    @pl.when(step == 0)
    def _init():
        acc_ref[0] = jnp.float32(0.0)

    lanes = x_ref.shape[-1]

    # Per-lane product with (0.5 * weights) tiled across the lane axis.
    xw = x_ref[...] * w_ref[...]                       # (tm, lanes) f32

    # Sum each aligned group of e_pad lanes with a log2(e_pad) roll-add tree.
    # The same tree is applied to the group ids so we can identify, in a
    # direction-agnostic way, which lane of each group holds the full sum.
    g = xw
    q = gid_ref[...]                                   # (8, lanes) i32
    p = q
    shift = 1
    while shift < e_pad:                               # static unroll
        amt = lanes - shift                            # cyclic roll by -shift
        g = g + pltpu.roll(g, shift=amt, axis=1)
        p = p + pltpu.roll(p, shift=amt, axis=1)
        shift *= 2

    # A lane holds a complete, aligned group sum iff all e_pad group ids in
    # its roll window are identical, i.e. their sum equals e_pad * own id.
    mask = (p == e_pad * q)[0:1, :]                    # (1, lanes) bool

    y = jnp.tanh(heb_ref[0] + g)                       # EUP tanh on all lanes
    y = jnp.where(mask, y, jnp.float32(0.0))
    acc_ref[0] += jnp.sum(y)

    @pl.when(step == pl.num_programs(1) - 1)
    def _finalize():
        o_ref[0, 0] = acc_ref[0]


def _round_up(x: int, m: int) -> int:
    return ((x + m - 1) // m) * m


def logistic_energy_model(x, weights, bias, *, tile_rows=8192, lanes=128,
                          num_chunks=2, vmem_limit_bytes=32 * 1024 * 1024):
    """Pallas equivalent of LogisticEnergyModel.forward.

    x: (..., E) array, weights: (E,), bias: scalar.  Returns a scalar f32.
    """
    weights = jnp.asarray(weights, jnp.float32)
    E = int(weights.shape[0])
    xf = jnp.asarray(x, jnp.float32).reshape(-1, E)
    N = int(xf.shape[0])
    if N == 0:
        return jnp.float32(0.0)   # matches the empty-input combinator

    e_pad = 1 if E <= 1 else int(pl.next_power_of_2(E))
    if e_pad > lanes // 2:
        # TODO(synk): support > lanes//2 energies (needs a multi-group /
        # multi-vreg-row reduction instead of the in-row roll tree).
        raise NotImplementedError("logistic_energy_model supports at most 64 energies")

    if e_pad != E:
        xf = jnp.pad(xf, ((0, 0), (0, e_pad - E)))     # pad energies with weight 0
        w_pad = jnp.pad(weights, (0, e_pad - E))
    else:
        w_pad = weights

    rows_per_vrow = lanes // e_pad                     # logical rows per lane-dense row
    nr_min = pl.cdiv(N, rows_per_vrow)                 # lane-dense rows needed

    # Grid sizing: leading "parallel" chunk axis (v7x megacore) + trailing
    # "arbitrary" reduction axis; big tiles to amortize per-step overhead.
    nc = max(1, min(int(num_chunks), nr_min // 8)) if nr_min >= 8 else 1
    steps = pl.cdiv(nr_min, nc * int(tile_rows))
    tm = _round_up(pl.cdiv(nr_min, nc * steps), 8)
    nr = nc * steps * tm

    pad_rows = nr * rows_per_vrow - N
    if pad_rows:
        xf = jnp.pad(xf, ((0, pad_rows), (0, 0)))
    x2d = xf.reshape(nr, lanes)                        # free: row-major contiguous

    # 0.5 folded into the weights (tanh(0.5*s) identity), tiled to a lane row.
    w_row = jnp.tile(0.5 * w_pad, rows_per_vrow).reshape(1, lanes)
    # Lane -> group-id map used by the in-kernel mask probe.
    gid = jnp.tile((jnp.arange(lanes, dtype=jnp.int32) // e_pad)[None, :], (8, 1))
    # 0.5 * E * bias folded into a single SMEM scalar.
    heb = jnp.float32(0.5 * E) * jnp.asarray(bias, jnp.float32)
    heb_arr = heb.reshape(1)

    kernel = functools.partial(_logistic_energy_kernel, e_pad=e_pad)

    partials = pl.pallas_call(
        kernel,
        out_shape=jax.ShapeDtypeStruct((nc, 1), jnp.float32),
        grid_spec=pltpu.PrefetchScalarGridSpec(
            num_scalar_prefetch=0,
            grid=(nc, steps),
            in_specs=[
                pl.BlockSpec((tm, lanes),
                             lambda c, s, _steps=steps: (c * _steps + s, 0)),
                pl.BlockSpec((1, lanes), lambda c, s: (0, 0)),
                pl.BlockSpec((8, lanes), lambda c, s: (0, 0)),
                pl.BlockSpec(memory_space=pltpu.SMEM),
            ],
            out_specs=pl.BlockSpec((1, 1), lambda c, s: (c, 0),
                                   memory_space=pltpu.SMEM),
            scratch_shapes=[pltpu.SMEM((1,), jnp.float32)],
        ),
        compiler_params=pltpu.CompilerParams(
            dimension_semantics=("parallel", "arbitrary"),
            vmem_limit_bytes=int(vmem_limit_bytes),
        ),
    )(x2d, w_row, gid, heb_arr)

    total = jnp.sum(partials)
    if pad_rows:
        # Every padded (all-zero) logical row contributed tanh(0.5*E*bias).
        total = total - jnp.float32(pad_rows) * jnp.tanh(heb)
    return total


def _reference(x, weights, bias):
    s = jnp.sum(bias + weights * x, axis=-1)
    return jnp.sum(2.0 * jax.nn.sigmoid(s) - 1.0)


if __name__ == "__main__":
    key = jax.random.PRNGKey(0)
    k1, k2, k3, kw = jax.random.split(key, 4)

    # Case 1: mirrors the module's default init (weights=1.0, bias=0.0), E=4.
    E = 4
    w1 = jnp.ones((E,), dtype=jnp.float32)
    b1 = jnp.float32(0.0)
    x1 = jax.random.normal(k1, (2, 128, E), dtype=jnp.float32)
    out1 = jax.block_until_ready(logistic_energy_model(x1, w1, b1))
    ref1 = _reference(x1, w1, b1)
    assert jnp.allclose(out1, ref1, atol=5e-3, rtol=1e-4), (out1, ref1)

    # Case 2: E=3 (energy-axis padding), row count not a multiple of 32,
    # non-zero bias (exercises the padded-row correction).
    w2 = jax.random.normal(kw, (3,), dtype=jnp.float32)
    b2 = jnp.float32(0.25)
    x2 = jax.random.normal(k2, (2, 250, 3), dtype=jnp.float32)
    out2 = jax.block_until_ready(logistic_energy_model(x2, w2, b2))
    ref2 = _reference(x2, w2, b2)
    assert jnp.allclose(out2, ref2, atol=5e-3, rtol=1e-4), (out2, ref2)

    # Case 3: force a (2-chunk x 2-step) grid at a small size to exercise the
    # parallel chunk axis and the cross-step SMEM accumulation path.
    x3 = jax.random.normal(k3, (4, 256, E), dtype=jnp.float32)
    out3 = jax.block_until_ready(
        logistic_energy_model(x3, w1, b1, tile_rows=8, num_chunks=2))
    ref3 = _reference(x3, w1, b1)
    assert jnp.allclose(out3, ref3, atol=5e-3, rtol=1e-4), (out3, ref3)

    print("KERNEL_OK")
</pallas_src>

<mosaic_0001>
module attributes {stable_mosaic.version = 11 : i64} {
  func.func @_logistic_energy_kernel(%arg0: i32, %arg1: i32, %arg2: memref<8x128xf32, #tpu.memory_space<vmem>>, %arg3: memref<1x128xf32, #tpu.memory_space<vmem>>, %arg4: memref<8x128xi32, #tpu.memory_space<vmem>>, %arg5: memref<1xf32, #tpu.memory_space<smem>>, %arg6: memref<1x1xf32, #tpu.memory_space<smem>>, %arg7: memref<1xf32, #tpu.memory_space<smem>>) attributes {dimension_semantics = [#tpu.dimension_semantics<parallel>, #tpu.dimension_semantics<arbitrary>], iteration_bounds = array<i64: 1, 1>, scalar_prefetch = 0 : i64, scratch_operands = 1 : i64, tpu.core_type = #tpu.core_type<tc>, window_params = [{transform_indices = @transform_0, window_bounds = array<i64: 8, 128>}, {pipeline_mode = #tpu.pipeline_mode<synchronous>, transform_indices = @transform_1, window_bounds = array<i64: 1, 128>}, {pipeline_mode = #tpu.pipeline_mode<synchronous>, transform_indices = @transform_2, window_bounds = array<i64: 8, 128>}, {transform_indices = @transform_3, window_bounds = array<i64: 1>}, {transform_indices = @transform_4, window_bounds = array<i64: 1, 1>}]} {
    %c0_i32 = arith.constant 0 : i32
    %0 = arith.cmpi eq, %arg1, %c0_i32 : i32
    %1 = arith.extui %0 : i1 to i32
    %c0_i32_0 = arith.constant 0 : i32
    %2 = arith.cmpi ne, %1, %c0_i32_0 : i32
    scf.if %2 {
      %cst_14 = arith.constant 0.000000e+00 : f32
      %c0_15 = arith.constant 0 : index
      %38 = memref.load %arg7[%c0_15] : memref<1xf32, #tpu.memory_space<smem>>
      memref.store %cst_14, %arg7[%c0_15] : memref<1xf32, #tpu.memory_space<smem>>
    } else {
    }
    %c0 = arith.constant 0 : index
    %c0_1 = arith.constant 0 : index
    %3 = vector.load %arg2[%c0, %c0_1] : memref<8x128xf32, #tpu.memory_space<vmem>>, vector<8x128xf32>
    %c0_2 = arith.constant 0 : index
    %c0_3 = arith.constant 0 : index
    %4 = vector.load %arg3[%c0_2, %c0_3] : memref<1x128xf32, #tpu.memory_space<vmem>>, vector<1x128xf32>
    %5 = vector.broadcast %4 : vector<1x128xf32> to vector<8x128xf32>
    %6 = arith.mulf %3, %5 : vector<8x128xf32>
    %c0_4 = arith.constant 0 : index
    %c0_5 = arith.constant 0 : index
    %7 = vector.load %arg4[%c0_4, %c0_5] : memref<8x128xi32, #tpu.memory_space<vmem>>, vector<8x128xi32>
    %c127_i32 = arith.constant 127 : i32
    %8 = tpu.dynamic_rotate %6 by %c127_i32 dim 1 : vector<8x128xf32>, i32 -> vector<8x128xf32>
    %9 = arith.addf %6, %8 : vector<8x128xf32>
    %c127_i32_6 = arith.constant 127 : i32
    %10 = tpu.dynamic_rotate %7 by %c127_i32_6 dim 1 : vector<8x128xi32>, i32 -> vector<8x128xi32>
    %11 = arith.addi %7, %10 : vector<8x128xi32>
    %c126_i32 = arith.constant 126 : i32
    %12 = tpu.dynamic_rotate %9 by %c126_i32 dim 1 : vector<8x128xf32>, i32 -> vector<8x128xf32>
    %13 = arith.addf %9, %12 : vector<8x128xf32>
    %c126_i32_7 = arith.constant 126 : i32
    %14 = tpu.dynamic_rotate %11 by %c126_i32_7 dim 1 : vector<8x128xi32>, i32 -> vector<8x128xi32>
    %15 = arith.addi %11, %14 : vector<8x128xi32>
    %c4_i32 = arith.constant 4 : i32
    %16 = vector.broadcast %c4_i32 : i32 to vector<8x128xi32>
    %17 = arith.muli %16, %7 : vector<8x128xi32>
    %18 = arith.cmpi eq, %15, %17 : vector<8x128xi32>
    %19 = vector.extract_strided_slice %18 {offsets = [0, 0], sizes = [1, 128], strides = [1, 1]} : vector<8x128xi1> to vector<1x128xi1>
    %c0_8 = arith.constant 0 : index
    %20 = memref.load %arg5[%c0_8] : memref<1xf32, #tpu.memory_space<smem>>
    %21 = vector.broadcast %20 : f32 to vector<8x128xf32>
    %22 = arith.addf %21, %13 : vector<8x128xf32>
    %23 = math.tanh %22 : vector<8x128xf32>
    %cst = arith.constant 0.000000e+00 : f32
    %24 = vector.shape_cast %19 : vector<1x128xi1> to vector<1x128xi1>
    %25 = vector.broadcast %24 : vector<1x128xi1> to vector<8x128xi1>
    %26 = vector.broadcast %cst : f32 to vector<8x128xf32>
    %27 = arith.select %25, %23, %26 : vector<8x128xi1>, vector<8x128xf32>
    %c0_9 = arith.constant 0 : index
    %28 = memref.load %arg7[%c0_9] : memref<1xf32, #tpu.memory_space<smem>>
    %29 = vector.shape_cast %27 : vector<8x128xf32> to vector<1x8x128xf32>
    %cst_10 = arith.constant dense<0.000000e+00> : vector<1xf32>
    %30 = vector.multi_reduction <add>, %29, %cst_10 [1, 2] : vector<1x8x128xf32> to vector<1xf32>
    %31 = vector.shape_cast %30 : vector<1xf32> to vector<1x1x1xf32>
    %32 = vector.extract %31[0, 0, 0] : f32 from vector<1x1x1xf32>
    %33 = arith.addf %28, %32 : f32
    %c0_11 = arith.constant 0 : index
    %34 = memref.load %arg7[%c0_11] : memref<1xf32, #tpu.memory_space<smem>>
    memref.store %33, %arg7[%c0_11] : memref<1xf32, #tpu.memory_space<smem>>
    %c0_i32_12 = arith.constant 0 : i32
    %35 = arith.cmpi eq, %arg1, %c0_i32_12 : i32
    %36 = arith.extui %35 : i1 to i32
    %c0_i32_13 = arith.constant 0 : i32
    %37 = arith.cmpi ne, %36, %c0_i32_13 : i32
    scf.if %37 {
      %c0_14 = arith.constant 0 : index
      %38 = memref.load %arg7[%c0_14] : memref<1xf32, #tpu.memory_space<smem>>
      %c0_15 = arith.constant 0 : index
      %c0_16 = arith.constant 0 : index
      %39 = memref.load %arg6[%c0_15, %c0_16] : memref<1x1xf32, #tpu.memory_space<smem>>
      memref.store %38, %arg6[%c0_15, %c0_16] : memref<1x1xf32, #tpu.memory_space<smem>>
    } else {
    }
    return
  }
  func.func @transform_0(%arg0: i32, %arg1: i32) -> (i32, i32) {
    %c1_i32 = arith.constant 1 : i32
    %0 = arith.muli %arg0, %c1_i32 : i32
    %1 = arith.addi %0, %arg1 : i32
    %c0_i32 = arith.constant 0 : i32
    %c0_i32_0 = arith.constant 0 : i32
    return %1, %c0_i32 : i32, i32
  }
  func.func @transform_1(%arg0: i32, %arg1: i32) -> (i32, i32) {
    %c0_i32 = arith.constant 0 : i32
    %c0_i32_0 = arith.constant 0 : i32
    %c0_i32_1 = arith.constant 0 : i32
    return %c0_i32, %c0_i32_0 : i32, i32
  }
  func.func @transform_2(%arg0: i32, %arg1: i32) -> (i32, i32) {
    %c0_i32 = arith.constant 0 : i32
    %c0_i32_0 = arith.constant 0 : i32
    %c0_i32_1 = arith.constant 0 : i32
    return %c0_i32, %c0_i32_0 : i32, i32
  }
  func.func @transform_3(%arg0: i32, %arg1: i32) -> i32 {
    %c0_i32 = arith.constant 0 : i32
    %c0_i32_0 = arith.constant 0 : i32
    return %c0_i32 : i32
  }
  func.func @transform_4(%arg0: i32, %arg1: i32) -> (i32, i32) {
    %c0_i32 = arith.constant 0 : i32
    %c0_i32_0 = arith.constant 0 : i32
    return %arg0, %c0_i32 : i32, i32
  }
}

</mosaic_0001>

<llo_original>
// kernel: tpu_custom_call.1
$region0: #{tpu_custom_call.1}
  #allocation0 [shape = 'u32[]', space=smem, size = 0x4, offset = 0x4, fixed_abs, tag = 'smem constant byte address 0x4 - core index']
  #allocation1 [shape = 'u32[72,128]{1,0:T(1,128)}', space=vmem, size = 0x9000, scoped, tag = 'internal scratch']
  #allocation2 [shape = 'f32[1]{0:T(128)}', space=smem, size = 0x200, scoped, tag = 'scratch operand']
  #allocation3 [shape = 'f32[1]{0:T(128)S(6)}', space=smem, size = 0x200, scoped, tag = 'scoped memory for tpu_custom_call.1']
  %s0 = inlined_call_operand.hbm [shape: f32[8,128], index: 0, kind: input, shape index: {}]
  %s1 = inlined_call_operand.vmem [shape: f32[1,128], index: 1, kind: input, shape index: {}]
  %s2 = inlined_call_operand.hbm [shape: s32[8,128], index: 2, kind: input, shape index: {}]
  %s3 = inlined_call_operand.<no memory space> [shape: f32[1], index: 3, kind: input, shape index: {}]
  %s4 = inlined_call_operand.hbm [shape: f32[1,1], index: 4, kind: output, shape index: {}]
  %s5 = sld [smem:[#allocation0]]
  $region42: #{tpu_custom_call.1} parent=0
    _
  %s7 = ssub.s32 1, %s5
  %s8 = scalar_select 0, %s7, %s5
  %9 = sst [smem:[#allocation3]] %s3
  $region1: #{tpu_custom_call.1} parent=0
    #allocation4 [shape = 'u8[4096]{0}', space=vmem, size = 0x1000, scoped, tag = 'input window, operand 0, single buffered']
    #allocation5 [shape = 's32[1]{0}', space=sflag, size = 0x4, scoped, tag = 'scoped memory for tpu_custom_call.1']
    #allocation6 [shape = 's32[1]{0}', space=sflag, size = 0x4, scoped, tag = 'scoped memory for tpu_custom_call.1']
    #allocation7 [shape = 'u8[4096]{0}', space=vmem, size = 0x1000, scoped, tag = 'input window, operand 2, single buffered']
    #allocation8 [shape = 's32[1]{0}', space=sflag, size = 0x4, scoped, tag = 'scoped memory for tpu_custom_call.1']
    #allocation9 [shape = 'u8[512]{0}', space=smem, size = 0x200, scoped, tag = 'output window, operand 0, single buffered']
    %10 = vsyncpa [#allocation5], 0
    %11 = vsyncpa [#allocation8], 0
    %12 = vsyncpa [#allocation6], 0
    // Predicated region
    $region2: #{tpu_custom_call.1} parent=1 // pred_check
      _
    $region3: #{tpu_custom_call.1} parent=1 // pred_check_branch
      %14 = sbr.rel (0) target = $region5
    $region4: #{tpu_custom_call.1} parent=1 // pred_region
      %s15 = sadd.s32 0, 0
      %17 = vsyncadd [#allocation5], 0
      %s18 = smul.addr %s15, 8
      %s19 = scalar_lea.hbm %s0, %s18
      %s21 = sshll.u32 %s19, 4
      %s22 = int_to_ptr.hbm [resolvable:$true] %s21
      %s23 = sshll.u32 [#allocation4], 4
      %s24 = int_to_ptr.vmem [resolvable:$true] %s23
      %26 = dma.hbm_to_vmem [thread:$0]  %s22, 128, %s24, [#allocation5]
    $region5: #{tpu_custom_call.1} parent=1 // pred_fallthru
      _
    // Predicated region
    $region6: #{tpu_custom_call.1} parent=1 // pred_check
      _
    $region7: #{tpu_custom_call.1} parent=1 // pred_check_branch
      %28 = sbr.rel (0) target = $region9
    $region8: #{tpu_custom_call.1} parent=1 // pred_region
      _
    $region9: #{tpu_custom_call.1} parent=1 // pred_fallthru
      _
    // Predicated region
    $region10: #{tpu_custom_call.1} parent=1 // pred_check
      _
    $region11: #{tpu_custom_call.1} parent=1 // pred_check_branch
      %30 = sbr.rel (0) target = $region13
    $region12: #{tpu_custom_call.1} parent=1 // pred_region
      %32 = vsyncadd [#allocation8], 0
      %s34 = sshll.u32 %s2, 4
      %s35 = int_to_ptr.hbm [resolvable:$true] %s34
      %s36 = sshll.u32 [#allocation7], 4
      %s37 = int_to_ptr.vmem [resolvable:$true] %s36
      %39 = dma.hbm_to_vmem [thread:$0]  %s35, 128, %s37, [#allocation8]
    $region13: #{tpu_custom_call.1} parent=1 // pred_fallthru
      _
    // Predicated region
    $region14: #{tpu_custom_call.1} parent=1 // pred_check
      _
    $region15: #{tpu_custom_call.1} parent=1 // pred_check_branch
      %41 = sbr.rel (0) target = $region17
    $region16: #{tpu_custom_call.1} parent=1 // pred_region
      _
    $region17: #{tpu_custom_call.1} parent=1 // pred_fallthru
      _
    // Predicated region
    $region18: #{tpu_custom_call.1} parent=1 // pred_check
      _
    $region19: #{tpu_custom_call.1} parent=1 // pred_check_branch
      %43 = sbr.rel (0) target = $region21
    $region20: #{tpu_custom_call.1} parent=1 // pred_region
      %45 = dma.done [#allocation5], 128
    $region21: #{tpu_custom_call.1} parent=1 // pred_fallthru
      _
    // Predicated region
    $region22: #{tpu_custom_call.1} parent=1 // pred_check
      _
    $region23: #{tpu_custom_call.1} parent=1 // pred_check_branch
      %47 = sbr.rel (0) target = $region25
    $region24: #{tpu_custom_call.1} parent=1 // pred_region
      %49 = dma.done [#allocation8], 128
    $region25: #{tpu_custom_call.1} parent=1 // pred_fallthru
      _
    %s50 = sadd.s32 0, 0
    %p51 = scmp.eq.s32.totalorder 0, 0
    // Predicated region
    $region26: #{tpu_custom_call.1} parent=1 // pred_check
      %p52 = pneg %p51
    $region27: #{tpu_custom_call.1} parent=1 // pred_check_branch
      %54 = sbr.rel (%p52) target = $region29
    $region28: #{tpu_custom_call.1} parent=1 // pred_region
      %s55 = scalar_lea.smem [#allocation2], 0
      %56 = sst [smem:[%s55]] 0.0
    $region29: #{tpu_custom_call.1} parent=1 // pred_fallthru
      _
    %v57 = vld [vmem:[#allocation4] sm:$0xff]
    %v58 = vld [vmem:[%s1] sm:$0x1]
    %v60 = vperm.slane %v58, 0
    %v62 = vmul.f32 %v57, %v60
    %v63 = vld [vmem:[#allocation7] sm:$0xff]
    %64 = vrot.lane.b32.xlu0 %v62, 127
    %v65 = vpop.permute.xlu0 %64
    %v66 = vadd.f32 %v62, %v65
    %67 = vrot.lane.b32.xlu0 %v63, 127
    %v68 = vpop.permute.xlu0 %67
    %v69 = vadd.s32 %v63, %v68
    %70 = vrot.lane.b32.xlu0 %v66, 126
    %v71 = vpop.permute.xlu0 %70
    %v72 = vadd.f32 %v66, %v71
    %73 = vrot.lane.b32.xlu0 %v69, 126
    %v74 = vpop.permute.xlu0 %73
    %v75 = vadd.s32 %v69, %v74
    %v76 = vmul.u32 %v63, 4
    %vm77 = vcmp.eq.s32.totalorder %v75, %v76
    %s78 = sld [smem:[#allocation3]]
    %v79 = vstv %s78
    %v80 = vadd.f32 %v79, %v72
    %v81 = vtanh.pop %v80
    %v82 = vsel %vm77, 1, 0
    %vm83 = vcmp.eq.s32.totalorder %v82, 1
    %v85 = vrot.slane %v81, 1
    %v86 = vrot.slane %v81, 2
    %v87 = vrot.slane %v81, 3
    %v88 = vrot.slane %v81, 4
    %v89 = vrot.slane %v81, 5
    %v90 = vrot.slane %v81, 6
    %v91 = vrot.slane %v81, 7
    %v100 = vsel %vm83, %v81, 0.0
    %v101 = vsel %vm83, %v85, 0.0
    %v102 = vsel %vm83, %v86, 0.0
    %v103 = vsel %vm83, %v87, 0.0
    %v104 = vsel %vm83, %v88, 0.0
    %v105 = vsel %vm83, %v89, 0.0
    %v106 = vsel %vm83, %v90, 0.0
    %v107 = vsel %vm83, %v91, 0.0
    %s108 = sld [smem:[#allocation2]]
    %v117 = vrot.slane %v101, 7
    %vm118 = vcmask 1041409
    %v119 = vsel %vm118, %v117, %v100
    %v120 = vrot.slane %v102, 6
    %vm121 = vcmask 1042434
    %v122 = vsel %vm121, %v120, %v119
    %v123 = vrot.slane %v103, 5
    %vm124 = vcmask 1043459
    %v125 = vsel %vm124, %v123, %v122
    %v126 = vrot.slane %v104, 4
    %vm127 = vcmask 1044484
    %v128 = vsel %vm127, %v126, %v125
    %v129 = vrot.slane %v105, 3
    %vm130 = vcmask 1045509
    %v131 = vsel %vm130, %v129, %v128
    %v132 = vrot.slane %v106, 2
    %vm133 = vcmask 1046534
    %v134 = vsel %vm133, %v132, %v131
    %v135 = vrot.slane %v107, 1
    %vm136 = vcmask 1047559
    %v137 = vsel %vm136, %v135, %v134
    %139 = vadd.xlane.f32.xlu0 %v137
    %v140 = vpop.xlane.xlu0 %139
    %v141 = vrot.slane %v140, 4
    %v142 = vadd.f32 %v140, %v141
    %v143 = vrot.slane %v142, 2
    %v144 = vadd.f32 %v142, %v143
    %v145 = vrot.slane %v144, 1
    %v146 = vadd.f32 %v144, %v145
    %s147 = vtos %v146
    %s148 = sadd.f32 %s108, %s147
    %s149 = scalar_lea.smem [#allocation2], 0
    %150 = sst [smem:[%s149]] %s148
    // Predicated region
    $region30: #{tpu_custom_call.1} parent=1 // pred_check
      %p151 = pneg %p51
    $region31: #{tpu_custom_call.1} parent=1 // pred_check_branch
      %153 = sbr.rel (%p151) target = $region33
    $region32: #{tpu_custom_call.1} parent=1 // pred_region
      %s154 = sld [smem:[#allocation2]]
      %s155 = scalar_lea.smem [#allocation9], 0
      %156 = sst [smem:[%s155]] %s154
    $region33: #{tpu_custom_call.1} parent=1 // pred_fallthru
      _
    // Predicated region
    $region34: #{tpu_custom_call.1} parent=1 // pred_check
      _
    $region35: #{tpu_custom_call.1} parent=1 // pred_check_branch
      %158 = sbr.rel (0) target = $region37
    $region36: #{tpu_custom_call.1} parent=1 // pred_region
      %160 = vsyncadd [#allocation6], 0
      %s162 = sshll.u32 %s4, 4
      %s163 = int_to_ptr.hbm [resolvable:$true] %s162
      %165 = dma.smem_to_hbm [#allocation9], 16, %s163, [#allocation6]
    $region37: #{tpu_custom_call.1} parent=1 // pred_fallthru
      _
    // Predicated region
    $region38: #{tpu_custom_call.1} parent=1 // pred_check
      _
    $region39: #{tpu_custom_call.1} parent=1 // pred_check_branch
      %167 = sbr.rel (0) target = $region41
    $region40: #{tpu_custom_call.1} parent=1 // pred_region
      %169 = dma.done [#allocation6], 16
    $region41: #{tpu_custom_call.1} parent=1 // pred_fallthru
      _
    %170 = sfence
    %171 = vsyncpa [#allocation5], 1
    %172 = vsyncpa [#allocation8], 1
    %173 = vsyncpa [#allocation6], 1

</llo_original>
